<compile_context>
chip_gen: v6e
topology: v6e:2x2x1
jax: 0.10.0
libtpu: 0.0.40
codegen_flags: <defaults>
</compile_context>

<pallas_src>
import jax
import jax.numpy as jnp
from jax.experimental import pallas as pl
from jax.experimental.pallas import tpu as pltpu


def _mlp_value_kernel(x_ref, w1_ref, b1_ref, w2_ref, b2_ref, out_ref):
    """Fused 2-layer MLP: tanh(tanh(x@W1+b1)@W2+b2), all tiles in VMEM."""
    # Layer 1: Linear(F -> H1) + Tanh.  bf16 operands on the MXU, f32 acc,
    # bias add + tanh kept in f32 (safe on v5e; negligible cost elsewhere).
    x = x_ref[...].astype(jnp.bfloat16)
    h1 = jnp.dot(x, w1_ref[...], preferred_element_type=jnp.float32)
    h1 = jnp.tanh(h1 + b1_ref[...])

    # Layer 2: Linear(H1 -> H2) + Tanh.
    h2 = jnp.dot(h1.astype(jnp.bfloat16), w2_ref[...],
                 preferred_element_type=jnp.float32)
    h2 = jnp.tanh(h2 + b2_ref[...])

    out_ref[...] = h2.astype(out_ref.dtype)


def _round_up(x: int, m: int) -> int:
    return ((x + m - 1) // m) * m


def prepare_value_net_params(w1, b1, w2, b2):
    """One-time param conversion (hoist out of the per-call path).

    w1: (F, H1), w2: (H1, H2) in (in, out) layout (PyTorch weight transposed).
    b1, b2: (H1,) / (H2,) or (1, H1) / (1, H2).
    Weights -> bf16 (halves weight DMA, feeds the MXU directly);
    biases -> f32 row vectors (bias add + tanh stay in f32).
    """
    return (jnp.asarray(w1, jnp.bfloat16),
            jnp.asarray(b1, jnp.float32).reshape(1, -1),
            jnp.asarray(w2, jnp.bfloat16),
            jnp.asarray(b2, jnp.float32).reshape(1, -1))


def mlp_value_extractor(features, w1_bf16, b1_f32, w2_bf16, b2_f32,
                        *, batch_tile: int = 4096):
    """
    features: (B, F), any float dtype (kept as-is; cast to bf16 in-kernel)
    w1_bf16:  (F, H1)  bf16      b1_f32: (1, H1) f32
    w2_bf16:  (H1, H2) bf16      b2_f32: (1, H2) f32
    returns latent_vf: (B, H2) in features.dtype
    """
    B, F = features.shape
    H1 = w1_bf16.shape[1]
    H2 = w2_bf16.shape[1]
    out_shape = jax.ShapeDtypeStruct((B, H2), features.dtype)

    if B <= batch_tile:
        # Single-shot, gridless call: no pipeline scaffolding, everything VMEM,
        # full-array blocks (no (8,128) padding requirement, no masked-store
        # concern worth an extra XLA pass at these sizes).
        return pl.pallas_call(
            _mlp_value_kernel,
            out_shape=out_shape,
            in_specs=[pl.BlockSpec(memory_space=pltpu.MemorySpace.VMEM)] * 5,
            out_specs=pl.BlockSpec(memory_space=pltpu.MemorySpace.VMEM),
        )(features, w1_bf16, b1_f32, w2_bf16, b2_f32)

    # Grid over the batch; weights/biases stay resident in VMEM across all
    # batch tiles (constant block index), activations stream.  Clamp the tile
    # so the grid has >= 2 steps (both v7x TensorCores get work; DMA overlaps
    # compute on v5e/v6e).  Partial last block: OOB rows are garbage but row-
    # independent and their output rows are never written back.
    tb = min(batch_tile, _round_up(pl.cdiv(B, 2), 8))
    grid = (pl.cdiv(B, tb),)
    return pl.pallas_call(
        _mlp_value_kernel,
        out_shape=out_shape,
        grid=grid,
        in_specs=[
            pl.BlockSpec((tb, F), lambda i: (i, 0)),     # F = full dim, no pad
            pl.BlockSpec((F, H1), lambda i: (0, 0)),     # resident weights
            pl.BlockSpec((1, H1), lambda i: (0, 0)),
            pl.BlockSpec((H1, H2), lambda i: (0, 0)),
            pl.BlockSpec((1, H2), lambda i: (0, 0)),
        ],
        out_specs=pl.BlockSpec((tb, H2), lambda i: (i, 0)),  # H2 = full dim
        compiler_params=pltpu.CompilerParams(
            dimension_semantics=("parallel",),
            vmem_limit_bytes=32 << 20,   # v5e scoped default is 16 MiB
        ),
    )(features, w1_bf16, b1_f32, w2_bf16, b2_f32)


def _torch_linear_init(key, fan_in, fan_out):
    """Deterministic init mimicking nn.Linear default (U[-1/sqrt(fan_in), +])."""
    kw, kb = jax.random.split(key)
    bound = 1.0 / jnp.sqrt(jnp.float32(fan_in))
    # PyTorch weight is (out, in); we return the transposed (in, out) form.
    w_t = jax.random.uniform(kw, (fan_in, fan_out), jnp.float32, -bound, bound)
    b = jax.random.uniform(kb, (1, fan_out), jnp.float32, -bound, bound)
    return w_t, b


def _reference(features, w1, b1, w2, b2):
    h1 = jnp.tanh(features.astype(jnp.float32) @ w1 + b1)
    return jnp.tanh(h1 @ w2 + b2)


if __name__ == "__main__":
    # MlpValueExtractor(feature_dim=32, net_arch=dict(vf=[64, 64]), activation_fn=nn.Tanh)
    B, F, H1, H2 = 8, 32, 64, 64

    key = jax.random.PRNGKey(0)
    k_x, k_l1, k_l2, k_xb = jax.random.split(key, 4)

    features = jax.random.normal(k_x, (B, F), jnp.float32)
    w1, b1 = _torch_linear_init(k_l1, F, H1)
    w2, b2 = _torch_linear_init(k_l2, H1, H2)

    # One-time param prep (bf16 weights, f32 biases) -- hoisted out of calls.
    params = prepare_value_net_params(w1, b1, w2, b2)

    # Small batch -> gridless single-shot path.
    out = jax.block_until_ready(mlp_value_extractor(features, *params))
    ref = _reference(features, w1, b1, w2, b2)
    assert out.shape == (B, H2)
    # bf16 MXU operands -> relaxed tolerance vs the f32 reference.
    assert jnp.allclose(out, ref, atol=2e-2, rtol=2e-2), "mismatch (small batch)"

    # Larger, non-multiple batch -> gridded path (partial last block, grid>=2).
    Bb = 4099
    feat_big = jax.random.normal(k_xb, (Bb, F), jnp.float32)
    out_big = jax.block_until_ready(
        mlp_value_extractor(feat_big, *params, batch_tile=2048))
    ref_big = _reference(feat_big, w1, b1, w2, b2)
    assert out_big.shape == (Bb, H2)
    assert jnp.allclose(out_big, ref_big, atol=2e-2, rtol=2e-2), "mismatch (big batch)"

    print("KERNEL_OK")
</pallas_src>

<mosaic_0001>
module attributes {stable_mosaic.version = 11 : i64} {
  func.func @_mlp_value_kernel(%arg0: memref<8x32xf32, #tpu.memory_space<vmem>>, %arg1: memref<32x64xbf16, #tpu.memory_space<vmem>>, %arg2: memref<1x64xf32, #tpu.memory_space<vmem>>, %arg3: memref<64x64xbf16, #tpu.memory_space<vmem>>, %arg4: memref<1x64xf32, #tpu.memory_space<vmem>>, %arg5: memref<8x64xf32, #tpu.memory_space<vmem>>) attributes {dimension_semantics = [], scalar_prefetch = 0 : i64, scratch_operands = 0 : i64, tpu.core_type = #tpu.core_type<tc>} {
    %c0 = arith.constant 0 : index
    %c0_0 = arith.constant 0 : index
    %0 = vector.load %arg0[%c0, %c0_0] : memref<8x32xf32, #tpu.memory_space<vmem>>, vector<8x32xf32>
    %1 = arith.truncf %0 : vector<8x32xf32> to vector<8x32xbf16>
    %c0_1 = arith.constant 0 : index
    %c0_2 = arith.constant 0 : index
    %2 = vector.load %arg1[%c0_1, %c0_2] : memref<32x64xbf16, #tpu.memory_space<vmem>>, vector<32x64xbf16>
    %cst = arith.constant dense<0.000000e+00> : vector<8x64xf32>
    %3 = tpu.matmul %1, %2, %cst {dimension_numbers = #tpu.dot_dimension_numbers<[1], [0], [0], [1], [0, 0, 1, 1], [], []>} : vector<8x32xbf16>, vector<32x64xbf16>, vector<8x64xf32> -> vector<8x64xf32>
    %c0_3 = arith.constant 0 : index
    %c0_4 = arith.constant 0 : index
    %4 = vector.load %arg2[%c0_3, %c0_4] : memref<1x64xf32, #tpu.memory_space<vmem>>, vector<1x64xf32>
    %5 = vector.broadcast %4 : vector<1x64xf32> to vector<8x64xf32>
    %6 = arith.addf %3, %5 : vector<8x64xf32>
    %7 = math.tanh %6 : vector<8x64xf32>
    %8 = arith.truncf %7 : vector<8x64xf32> to vector<8x64xbf16>
    %c0_5 = arith.constant 0 : index
    %c0_6 = arith.constant 0 : index
    %9 = vector.load %arg3[%c0_5, %c0_6] : memref<64x64xbf16, #tpu.memory_space<vmem>>, vector<64x64xbf16>
    %cst_7 = arith.constant dense<0.000000e+00> : vector<8x64xf32>
    %10 = tpu.matmul %8, %9, %cst_7 {dimension_numbers = #tpu.dot_dimension_numbers<[1], [0], [0], [1], [0, 0, 1, 1], [], []>} : vector<8x64xbf16>, vector<64x64xbf16>, vector<8x64xf32> -> vector<8x64xf32>
    %c0_8 = arith.constant 0 : index
    %c0_9 = arith.constant 0 : index
    %11 = vector.load %arg4[%c0_8, %c0_9] : memref<1x64xf32, #tpu.memory_space<vmem>>, vector<1x64xf32>
    %12 = vector.broadcast %11 : vector<1x64xf32> to vector<8x64xf32>
    %13 = arith.addf %10, %12 : vector<8x64xf32>
    %14 = math.tanh %13 : vector<8x64xf32>
    %c0_10 = arith.constant 0 : index
    %c0_11 = arith.constant 0 : index
    %15 = vector.load %arg5[%c0_10, %c0_11] : memref<8x64xf32, #tpu.memory_space<vmem>>, vector<8x64xf32>
    tpu.vector_store %arg5[%c0_10, %c0_11], %14 {strides = array<i32>} : memref<8x64xf32, #tpu.memory_space<vmem>>, vector<8x64xf32>,
    return
  }
}

</mosaic_0001>

<llo_original>
// kernel: tpu_custom_call.1
$region0: #{tpu_custom_call.1}
  #allocation0 [shape = 'u32[]', space=smem, size = 0x4, offset = 0x4, fixed_abs, tag = 'smem constant byte address 0x4 - core index']
  #allocation1 [shape = 'u32[144,128]{1,0:T(1,128)}', space=vmem, size = 0x12000, scoped, tag = 'internal scratch']
  %s0 = inlined_call_operand.hbm [shape: f32[8,32], index: 0, kind: input, shape index: {}]
  %s1 = inlined_call_operand.hbm [shape: bf16[32,64], index: 1, kind: input, shape index: {}]
  %s2 = inlined_call_operand.vmem [shape: f32[1,64], index: 2, kind: input, shape index: {}]
  %s3 = inlined_call_operand.hbm [shape: bf16[64,64], index: 3, kind: input, shape index: {}]
  %s4 = inlined_call_operand.vmem [shape: f32[1,64], index: 4, kind: input, shape index: {}]
  %s5 = inlined_call_operand.hbm [shape: f32[8,64], index: 5, kind: output, shape index: {}]
  %s6 = sld [smem:[#allocation0]]
  $region42: #{tpu_custom_call.1} parent=0
    _
  %s8 = ssub.s32 1, %s6
  %s9 = scalar_select 0, %s8, %s6
  $region1: #{tpu_custom_call.1} parent=0
    #allocation2 [shape = 'u8[4096]{0}', space=vmem, size = 0x1000, scoped, tag = 'input window, operand 0, single buffered']
    #allocation3 [shape = 's32[1]{0}', space=sflag, size = 0x4, scoped, tag = 'scoped memory for tpu_custom_call.1']
    #allocation4 [shape = 's32[1]{0}', space=sflag, size = 0x4, scoped, tag = 'scoped memory for tpu_custom_call.1']
    #allocation5 [shape = 'u8[8192]{0}', space=vmem, size = 0x2000, scoped, tag = 'input window, operand 1, single buffered']
    #allocation6 [shape = 's32[1]{0}', space=sflag, size = 0x4, scoped, tag = 'scoped memory for tpu_custom_call.1']
    #allocation7 [shape = 'u8[16384]{0}', space=vmem, size = 0x4000, scoped, tag = 'input window, operand 3, single buffered']
    #allocation8 [shape = 'u8[4096]{0}', space=vmem, size = 0x1000, scoped, tag = 'output window, operand 0, single buffered']
    %10 = vsyncpa [#allocation3], 0
    %11 = vsyncpa [#allocation6], 0
    %12 = vsyncpa [#allocation4], 0
    // Predicated region
    $region2: #{tpu_custom_call.1} parent=1 // pred_check
      _
    $region3: #{tpu_custom_call.1} parent=1 // pred_check_branch
      %14 = sbr.rel (0) target = $region5
    $region4: #{tpu_custom_call.1} parent=1 // pred_region
      %s16 = ssub.s32 128, 128
      %17 = vsyncadd [#allocation3], %s16
      %s19 = sshll.u32 [#allocation2], 4
      %s20 = int_to_ptr.vmem [resolvable:$true] %s19
      %22 = dma.hbm_to_vmem [thread:$0]  %s0, 128, %s20, [#allocation3]
    $region5: #{tpu_custom_call.1} parent=1 // pred_fallthru
      _
    // Predicated region
    $region6: #{tpu_custom_call.1} parent=1 // pred_check
      _
    $region7: #{tpu_custom_call.1} parent=1 // pred_check_branch
      %24 = sbr.rel (0) target = $region9
    $region8: #{tpu_custom_call.1} parent=1 // pred_region
      %s26 = ssub.s32 256, 256
      %27 = vsyncadd [#allocation6], %s26
      %s28 = sshll.u32 [#allocation5], 4
      %s29 = int_to_ptr.vmem [resolvable:$true] %s28
      %34 = dma.hbm_to_vmem [thread:$0]  %s1, 256, %s29, [#allocation6], 64, 64, 4
    $region9: #{tpu_custom_call.1} parent=1 // pred_fallthru
      _
    // Predicated region
    $region10: #{tpu_custom_call.1} parent=1 // pred_check
      _
    $region11: #{tpu_custom_call.1} parent=1 // pred_check_branch
      %36 = sbr.rel (0) target = $region13
    $region12: #{tpu_custom_call.1} parent=1 // pred_region
      _
    $region13: #{tpu_custom_call.1} parent=1 // pred_fallthru
      _
    // Predicated region
    $region14: #{tpu_custom_call.1} parent=1 // pred_check
      _
    $region15: #{tpu_custom_call.1} parent=1 // pred_check_branch
      %38 = sbr.rel (0) target = $region17
    $region16: #{tpu_custom_call.1} parent=1 // pred_region
      %s40 = ssub.s32 512, 512
      %41 = vsyncadd [#allocation6], %s40
      %s42 = sshll.u32 [#allocation7], 4
      %s43 = int_to_ptr.vmem [resolvable:$true] %s42
      %48 = dma.hbm_to_vmem [thread:$0]  %s3, 512, %s43, [#allocation6], 64, 64, 4
    $region17: #{tpu_custom_call.1} parent=1 // pred_fallthru
      _
    // Predicated region
    $region18: #{tpu_custom_call.1} parent=1 // pred_check
      _
    $region19: #{tpu_custom_call.1} parent=1 // pred_check_branch
      %50 = sbr.rel (0) target = $region21
    $region20: #{tpu_custom_call.1} parent=1 // pred_region
      _
    $region21: #{tpu_custom_call.1} parent=1 // pred_fallthru
      _
    // Predicated region
    $region22: #{tpu_custom_call.1} parent=1 // pred_check
      _
    $region23: #{tpu_custom_call.1} parent=1 // pred_check_branch
      %52 = sbr.rel (0) target = $region25
    $region24: #{tpu_custom_call.1} parent=1 // pred_region
      %53 = dma.done [#allocation3], 128
    $region25: #{tpu_custom_call.1} parent=1 // pred_fallthru
      _
    // Predicated region
    $region26: #{tpu_custom_call.1} parent=1 // pred_check
      _
    $region27: #{tpu_custom_call.1} parent=1 // pred_check_branch
      %55 = sbr.rel (0) target = $region29
    $region28: #{tpu_custom_call.1} parent=1 // pred_region
      %56 = dma.done [#allocation6], 256
    $region29: #{tpu_custom_call.1} parent=1 // pred_fallthru
      _
    // Predicated region
    $region30: #{tpu_custom_call.1} parent=1 // pred_check
      _
    $region31: #{tpu_custom_call.1} parent=1 // pred_check_branch
      %58 = sbr.rel (0) target = $region33
    $region32: #{tpu_custom_call.1} parent=1 // pred_region
      %59 = dma.done [#allocation6], 512
    $region33: #{tpu_custom_call.1} parent=1 // pred_fallthru
      _
    %v61 = vld [vmem:[#allocation2] sm:$0xff]
    %v62 = vpack.c.bf16 %v61, %v61
    %v63 = vld [vmem:[#allocation5] sm:$0xf]
    %v64 = vld [vmem:[#allocation5 + $0x4] sm:$0xf]
    %v65 = vld [vmem:[#allocation5 + $0x8] sm:$0xf]
    %v66 = vld [vmem:[#allocation5 + $0xc] sm:$0xf]
    %v67 = vld [vmem:[%s2] sm:$0x1]
    %v69 = vlaneseq
    %v70 = vshrl.u32 %v69, 7
    %v71 = vsub.s32 0, %v70
    %v72 = vrot.slane %v67, %v71
    %v78 = vunpack.c.l.b16 %v63
    %v79 = vunpack.c.l.b16 %v64
    %v80 = vunpack.c.l.b16 %v65
    %v81 = vunpack.c.l.b16 %v66
    %v82 = vpack.c.b16 %v79, %v78
    %v83 = vpack.c.b16 %v81, %v80
    %vm86 = vcmask 261120
    %v88 = vsel %vm86, %v62, 0
    %90 = vmatprep.subr.bf16.mxu0 0
    %91 = vmatpush1.bf16.msra.mxu0 0
    %92 = vmatprep.subr.bf16.mxu0 0
    %93 = vmatpush1.bf16.msra.mxu0 0
    %94 = vmatprep.subr.bf16.mxu0 0
    %95 = vmatpush1.bf16.msra.mxu0 0
    %96 = vmatprep.subr.bf16.mxu0 0
    %97 = vmatpush1.bf16.msra.mxu0 0
    %98 = vmatprep.subr.bf16.mxu0 0
    %99 = vmatpush1.bf16.msra.mxu0 0
    %100 = vmatprep.subr.bf16.mxu0 0
    %101 = vmatpush1.bf16.msra.mxu0 0
    %102 = vmatprep.subr.bf16.mxu0 0
    %103 = vmatpush1.bf16.msra.mxu0 %v83
    %104 = vmatprep.subr.bf16.mxu0 0
    %105 = vmatpush1.bf16.msra.mxu0 %v82
    %106 = vmatprep.subr.bf16.mxu0 0
    %107 = vmatpush2.bf16.msra.mxu0 0
    %108 = vmatprep.subr.bf16.mxu0 0
    %109 = vmatpush2.bf16.msra.mxu0 0
    %110 = vmatprep.subr.bf16.mxu0 0
    %111 = vmatpush2.bf16.msra.mxu0 0
    %112 = vmatprep.subr.bf16.mxu0 0
    %113 = vmatpush2.bf16.msra.mxu0 0
    %114 = vmatprep.subr.bf16.mxu0 0
    %115 = vmatpush2.bf16.msra.mxu0 0
    %116 = vmatprep.subr.bf16.mxu0 0
    %117 = vmatpush2.bf16.msra.mxu0 0
    %118 = vmatprep.subr.bf16.mxu0 0
    %119 = vmatpush2.bf16.msra.mxu0 0
    %120 = vmatprep.subr.bf16.mxu0 0
    %121 = vmatpush2.bf16.msra.mxu0 0
    %122 = vmatprep.mubr.bf16.mxu0 0
    %123 = vmatmul.mubr.bf16.gmra.mxu0 %v88
    %v124 = vpop.f32.mrf.mxu0
    %v125 = vadd.f32 %v72, %v124
    %v126 = vpop.f32.mrf.mxu0
    %v127 = vpop.f32.mrf.mxu0
    %v128 = vpop.f32.mrf.mxu0
    %129 = vdwg.mxu0
    %v130 = vtanh.pop %v125
    %v131 = vpack.c.bf16 %v130, %v130
    %v132 = vld [vmem:[#allocation7] sm:$0xf]
    %v133 = vld [vmem:[#allocation7 + $0x4] sm:$0xf]
    %v134 = vld [vmem:[#allocation7 + $0x8] sm:$0xf]
    %v135 = vld [vmem:[#allocation7 + $0xc] sm:$0xf]
    %v136 = vld [vmem:[#allocation7 + $0x10] sm:$0xf]
    %v137 = vld [vmem:[#allocation7 + $0x14] sm:$0xf]
    %v138 = vld [vmem:[#allocation7 + $0x18] sm:$0xf]
    %v139 = vld [vmem:[#allocation7 + $0x1c] sm:$0xf]
    %v140 = vld [vmem:[%s4] sm:$0x1]
    %v142 = vlaneseq
    %v143 = vshrl.u32 %v142, 7
    %v144 = vsub.s32 0, %v143
    %v145 = vrot.slane %v140, %v144
    %v155 = vunpack.c.l.b16 %v132
    %v156 = vunpack.c.l.b16 %v133
    %v157 = vunpack.c.l.b16 %v134
    %v158 = vunpack.c.l.b16 %v135
    %v159 = vunpack.c.l.b16 %v136
    %v160 = vunpack.c.l.b16 %v137
    %v161 = vunpack.c.l.b16 %v138
    %v162 = vunpack.c.l.b16 %v139
    %v163 = vpack.c.b16 %v156, %v155
    %v164 = vpack.c.b16 %v158, %v157
    %v165 = vpack.c.b16 %v160, %v159
    %v166 = vpack.c.b16 %v162, %v161
    %vm171 = vcmask 523264
    %v173 = vsel %vm171, %v131, 0
    %175 = vmatprep.subr.bf16.mxu0 0
    %176 = vmatpush1.bf16.msra.mxu0 0
    %177 = vmatprep.subr.bf16.mxu0 0
    %178 = vmatpush1.bf16.msra.mxu0 0
    %179 = vmatprep.subr.bf16.mxu0 0
    %180 = vmatpush1.bf16.msra.mxu0 0
    %181 = vmatprep.subr.bf16.mxu0 0
    %182 = vmatpush1.bf16.msra.mxu0 0
    %183 = vmatprep.subr.bf16.mxu0 0
    %184 = vmatpush1.bf16.msra.mxu0 %v166
    %185 = vmatprep.subr.bf16.mxu0 0
    %186 = vmatpush1.bf16.msra.mxu0 %v165
    %187 = vmatprep.subr.bf16.mxu0 0
    %188 = vmatpush1.bf16.msra.mxu0 %v164
    %189 = vmatprep.subr.bf16.mxu0 0
    %190 = vmatpush1.bf16.msra.mxu0 %v163
    %191 = vmatprep.subr.bf16.mxu0 0
    %192 = vmatpush2.bf16.msra.mxu0 0
    %193 = vmatprep.subr.bf16.mxu0 0
    %194 = vmatpush2.bf16.msra.mxu0 0
    %195 = vmatprep.subr.bf16.mxu0 0
    %196 = vmatpush2.bf16.msra.mxu0 0
    %197 = vmatprep.subr.bf16.mxu0 0
    %198 = vmatpush2.bf16.msra.mxu0 0
    %199 = vmatprep.subr.bf16.mxu0 0
    %200 = vmatpush2.bf16.msra.mxu0 0
    %201 = vmatprep.subr.bf16.mxu0 0
    %202 = vmatpush2.bf16.msra.mxu0 0
    %203 = vmatprep.subr.bf16.mxu0 0
    %204 = vmatpush2.bf16.msra.mxu0 0
    %205 = vmatprep.subr.bf16.mxu0 0
    %206 = vmatpush2.bf16.msra.mxu0 0
    %207 = vmatprep.mubr.bf16.mxu0 0
    %208 = vmatmul.mubr.bf16.gmra.mxu0 %v173
    %v209 = vpop.f32.mrf.mxu0
    %v210 = vadd.f32 %v145, %v209
    %v211 = vpop.f32.mrf.mxu0
    %v212 = vpop.f32.mrf.mxu0
    %v213 = vpop.f32.mrf.mxu0
    %214 = vdwg.mxu0
    %v215 = vtanh.pop %v210
    %216 = vst.msk [vmem:[#allocation8] sm:$0xff] %vm171, %v215
    // Predicated region
    $region34: #{tpu_custom_call.1} parent=1 // pred_check
      _
    $region35: #{tpu_custom_call.1} parent=1 // pred_check_branch
      %218 = sbr.rel (0) target = $region37
    $region36: #{tpu_custom_call.1} parent=1 // pred_region
      %s220 = ssub.s32 128, 128
      %221 = vsyncadd [#allocation4], %s220
      %s223 = sshll.u32 [#allocation8], 4
      %s224 = int_to_ptr.vmem [resolvable:$true] %s223
      %226 = dma.vmem_to_hbm [thread:$0]  %s224, 128, %s5, [#allocation4]
    $region37: #{tpu_custom_call.1} parent=1 // pred_fallthru
      _
    // Predicated region
    $region38: #{tpu_custom_call.1} parent=1 // pred_check
      _
    $region39: #{tpu_custom_call.1} parent=1 // pred_check_branch
      %228 = sbr.rel (0) target = $region41
    $region40: #{tpu_custom_call.1} parent=1 // pred_region
      %229 = dma.done [#allocation4], 128
    $region41: #{tpu_custom_call.1} parent=1 // pred_fallthru
      _
    %230 = vsyncpa [#allocation3], 1
    %231 = vsyncpa [#allocation6], 1
    %232 = vsyncpa [#allocation4], 1

</llo_original>
